<compile_context>
chip_gen: v5e
topology: v5e:2x2
jax: 0.10.0
libtpu: 0.0.40
codegen_flags: <defaults>
</compile_context>

<pallas_src>
import math

import jax
import jax.numpy as jnp
from jax.experimental import pallas as pl
from jax.experimental.pallas import tpu as pltpu


def _round_up(x, m):
    return ((x + m - 1) // m) * m


def _sublane_multiple(dtype):
    # Sublane packing multiple per element width: f32->8, bf16->16, int8->32.
    return {1: 32, 2: 16, 4: 8}.get(jnp.dtype(dtype).itemsize, 8)


def _interchange_kernel(dim_ref, base_ref, src_ref, out_ref):
    """out[:, :d] = source[:, :d]; out[:, d:] = base[:, d:].

    `src_ref` may be narrower than `base_ref`: only the first
    round_up(d, 128) source columns are ever needed.
    """
    d = dim_ref[0]                    # runtime scalar (SMEM, scalar-prefetched)
    src_cols = src_ref.shape[-1]      # static
    hidden = base_ref.shape[-1]       # static
    # Row-invariant lane mask, broadcast over the row axis by jnp.where.
    lane = jax.lax.broadcasted_iota(jnp.int32, (1, src_cols), 1)
    mask = lane < d
    if src_cols == hidden:
        out_ref[...] = jnp.where(mask, src_ref[...], base_ref[...])
    else:
        # Columns [0, src_cols): blend; columns [src_cols, hidden): pass-through.
        out_ref[:, :src_cols] = jnp.where(mask, src_ref[...], base_ref[:, :src_cols])
        out_ref[:, src_cols:] = base_ref[:, src_cols:]


def interchange_intervention(base, source, interchange_dim):
    """Pallas hot path: masked select along the hidden (lane) axis."""
    assert base.shape == source.shape and base.dtype == source.dtype
    d = int(interchange_dim)
    orig_shape = base.shape
    hidden = orig_shape[-1]

    # Degenerate cases: skip the kernel (and all HBM traffic) entirely.
    if d <= 0:
        return base
    if d >= hidden:
        return source

    rows = int(math.prod(orig_shape[:-1])) if len(orig_shape) > 1 else 1
    base2d = base.reshape(rows, hidden)
    src2d = source.reshape(rows, hidden)

    itemsize = jnp.dtype(base.dtype).itemsize
    sublane = _sublane_multiple(base.dtype)

    # Narrow source read: only the first round_up(d, 128) columns are needed.
    d_p = _round_up(d, 128)
    src_cols = hidden if d_p >= hidden else d_p

    # Block sizing: 2 buffers x (base + src + out) block bytes <= budget.
    bytes_per_block_row = (2 * hidden + src_cols) * itemsize
    budget_bytes = 40 << 20            # working-set target, under 48 MiB limit
    min_needed = 2 * sublane * bytes_per_block_row
    if min_needed > budget_bytes:
        # Extremely wide hidden: pure-JAX fallback (rare; see TODO above).
        lane = jnp.arange(hidden, dtype=jnp.int32)
        return jnp.where(lane < d, source, base)

    cand = (budget_bytes // (2 * bytes_per_block_row)) // sublane * sublane
    cand = max(cand, sublane)
    if cand >= rows:
        # Whole tensor fits one block; still split into >=2 grid steps when
        # possible so both v7x TensorCores stream rows and DMA pipelines.
        if rows >= 2 * sublane:
            block_rows = _round_up(pl.cdiv(rows, 2), sublane)
        else:
            block_rows = rows          # full-dim row block (always legal)
    else:
        block_rows = cand
    grid = (pl.cdiv(rows, block_rows),)   # tail block -> masked stores, no pad

    dim_arr = jnp.asarray([d], dtype=jnp.int32)
    base_spec = pl.BlockSpec((block_rows, hidden), lambda i, dim: (i, 0))
    src_spec = pl.BlockSpec((block_rows, src_cols), lambda i, dim: (i, 0))
    out_spec = pl.BlockSpec((block_rows, hidden), lambda i, dim: (i, 0))

    out2d = pl.pallas_call(
        _interchange_kernel,
        out_shape=jax.ShapeDtypeStruct((rows, hidden), base.dtype),
        grid_spec=pltpu.PrefetchScalarGridSpec(
            num_scalar_prefetch=1,
            grid=grid,
            in_specs=[base_spec, src_spec],
            out_specs=out_spec,
        ),
        compiler_params=pltpu.CompilerParams(
            dimension_semantics=("parallel",),   # shard row blocks across TCs
            vmem_limit_bytes=48 << 20,
        ),
        cost_estimate=pl.CostEstimate(
            flops=0,
            transcendentals=0,
            bytes_accessed=rows * (2 * hidden + src_cols) * itemsize,
        ),
    )(dim_arr, base2d, src2d)

    return out2d.reshape(orig_shape)


class Intervention:
    """JAX/Pallas port of the abstract torch Intervention (vanilla interchange)."""

    def __init__(self):
        self.trainble = False  # matches the (sic) attribute in the torch module
        self.interchange_dim = 0

    def set_interchange_dim(self, interchange_dim):
        self.interchange_dim = int(interchange_dim)

    def forward(self, base, source):
        return interchange_intervention(base, source, self.interchange_dim)

    __call__ = forward


if __name__ == "__main__":
    key = jax.random.PRNGKey(0)
    kb1, ks1, kb2, ks2 = jax.random.split(key, 4)

    interv = Intervention()

    # Case 1: hidden < 128 (full-width kernel path), aligned rows, 2-step grid.
    batch, seq, hidden = 2, 8, 32
    base = jax.random.normal(kb1, (batch, seq, hidden), dtype=jnp.float32)
    source = jax.random.normal(ks1, (batch, seq, hidden), dtype=jnp.float32)
    interv.set_interchange_dim(hidden // 2)  # swap first 16 of 32 features
    out = jax.block_until_ready(interv(base, source))
    d = interv.interchange_dim
    ref = jnp.concatenate([source[..., :d], base[..., d:]], axis=-1)
    assert out.shape == base.shape and out.dtype == base.dtype
    assert jnp.allclose(out, ref), "case 1 mismatch vs reference"

    # Case 2: hidden > 128 (narrow-source path), unaligned d and tail row block.
    batch, seq, hidden = 2, 9, 256
    base = jax.random.normal(kb2, (batch, seq, hidden), dtype=jnp.float32)
    source = jax.random.normal(ks2, (batch, seq, hidden), dtype=jnp.float32)
    interv.set_interchange_dim(100)
    out = jax.block_until_ready(interv(base, source))
    d = interv.interchange_dim
    ref = jnp.concatenate([source[..., :d], base[..., d:]], axis=-1)
    assert out.shape == base.shape and out.dtype == base.dtype
    assert jnp.allclose(out, ref), "case 2 mismatch vs reference"

    print("KERNEL_OK")
</pallas_src>

<mosaic_0001>
module attributes {stable_mosaic.version = 11 : i64} {
  func.func @_interchange_kernel(%arg0: i32, %arg1: memref<1xi32, #tpu.memory_space<smem>>, %arg2: memref<8x32xf32, #tpu.memory_space<vmem>>, %arg3: memref<8x32xf32, #tpu.memory_space<vmem>>, %arg4: memref<8x32xf32, #tpu.memory_space<vmem>>) attributes {dimension_semantics = [#tpu.dimension_semantics<parallel>], iteration_bounds = array<i64: 2>, scalar_prefetch = 1 : i64, scratch_operands = 0 : i64, tpu.core_type = #tpu.core_type<tc>, window_params = [{transform_indices = @transform_0, window_bounds = array<i64: 8, 32>}, {transform_indices = @transform_1, window_bounds = array<i64: 8, 32>}, {transform_indices = @transform_2, window_bounds = array<i64: 8, 32>}]} {
    %c0 = arith.constant 0 : index
    %0 = memref.load %arg1[%c0] : memref<1xi32, #tpu.memory_space<smem>>
    %1 = tpu.iota {dimensions = array<i32: 1>} : vector<1x32xi32>
    %2 = vector.broadcast %0 : i32 to vector<1x32xi32>
    %3 = arith.cmpi slt, %1, %2 : vector<1x32xi32>
    %c0_0 = arith.constant 0 : index
    %c0_1 = arith.constant 0 : index
    %4 = vector.load %arg3[%c0_0, %c0_1] : memref<8x32xf32, #tpu.memory_space<vmem>>, vector<8x32xf32>
    %c0_2 = arith.constant 0 : index
    %c0_3 = arith.constant 0 : index
    %5 = vector.load %arg2[%c0_2, %c0_3] : memref<8x32xf32, #tpu.memory_space<vmem>>, vector<8x32xf32>
    %6 = vector.shape_cast %3 : vector<1x32xi1> to vector<1x32xi1>
    %7 = vector.broadcast %6 : vector<1x32xi1> to vector<8x32xi1>
    %8 = arith.select %7, %4, %5 : vector<8x32xi1>, vector<8x32xf32>
    %c0_4 = arith.constant 0 : index
    %c0_5 = arith.constant 0 : index
    %9 = vector.load %arg4[%c0_4, %c0_5] : memref<8x32xf32, #tpu.memory_space<vmem>>, vector<8x32xf32>
    tpu.vector_store %arg4[%c0_4, %c0_5], %8 {strides = array<i32>} : memref<8x32xf32, #tpu.memory_space<vmem>>, vector<8x32xf32>,
    return
  }
  func.func @transform_0(%arg0: i32, %arg1: memref<1xi32, #tpu.memory_space<smem>>) -> (i32, i32) {
    %c0_i32 = arith.constant 0 : i32
    %c0_i32_0 = arith.constant 0 : i32
    return %arg0, %c0_i32 : i32, i32
  }
  func.func @transform_1(%arg0: i32, %arg1: memref<1xi32, #tpu.memory_space<smem>>) -> (i32, i32) {
    %c0_i32 = arith.constant 0 : i32
    %c0_i32_0 = arith.constant 0 : i32
    return %arg0, %c0_i32 : i32, i32
  }
  func.func @transform_2(%arg0: i32, %arg1: memref<1xi32, #tpu.memory_space<smem>>) -> (i32, i32) {
    %c0_i32 = arith.constant 0 : i32
    %c0_i32_0 = arith.constant 0 : i32
    return %arg0, %c0_i32 : i32, i32
  }
}

</mosaic_0001>

<llo_original>
// kernel: tpu_custom_call.1
$region0: #{tpu_custom_call.1}
  #allocation0 [shape = 'u32[]', space=smem, size = 0x4, offset = 0x4, fixed_abs, tag = 'smem constant byte address 0x4 - core index']
  #allocation1 [shape = 'u32[72,128]{1,0:T(1,128)}', space=vmem, size = 0x9000, scoped, tag = 'internal scratch']
  #allocation2 [shape = 's32[1]{0}', space=sflag, size = 0x4, scoped, tag = 'scoped memory for tpu_custom_call.1']
  #allocation3 [shape = 's32[1]{0:T(128)S(6)}', space=smem, size = 0x200, scoped, tag = 'prefetched SMEM operand 0']
  %s0 = inlined_call_operand.<no memory space> [shape: s32[1], index: 0, kind: input, shape index: {}]
  %s1 = inlined_call_operand.hbm [shape: f32[16,32], index: 1, kind: input, shape index: {}]
  %s2 = inlined_call_operand.hbm [shape: f32[16,32], index: 2, kind: input, shape index: {}]
  %s3 = inlined_call_operand.hbm [shape: f32[16,32], index: 3, kind: output, shape index: {}]
  %s4 = sld [smem:[#allocation0]]
  $region49: #{tpu_custom_call.1} parent=0
    _
  %s6 = ssub.s32 1, %s4
  %s7 = scalar_select 0, %s6, %s4
  %8 = sst [smem:[#allocation3]] %s0
  $region1: #{tpu_custom_call.1} parent=0
    #allocation4 [shape = 'u8[8192]{0}', space=vmem, size = 0x2000, scoped, tag = 'input window, operand 1']
    #allocation5 [shape = 's32[2]{0}', space=sflag, size = 0x8, scoped, tag = 'scoped memory for tpu_custom_call.1']
    #allocation6 [shape = 's32[2]{0}', space=sflag, size = 0x8, scoped, tag = 'scoped memory for tpu_custom_call.1']
    #allocation7 [shape = 'u8[8192]{0}', space=vmem, size = 0x2000, scoped, tag = 'input window, operand 2']
    #allocation8 [shape = 's32[2]{0}', space=sflag, size = 0x8, scoped, tag = 'scoped memory for tpu_custom_call.1']
    #allocation9 [shape = 'u8[8192]{0}', space=vmem, size = 0x2000, scoped, tag = 'output window, operand 0']
    %9 = vsyncpa [#allocation5], 0
    %s10 = scalar_lea.sflag [#allocation5], 1
    %11 = vsyncpa %s10, 0
    %12 = vsyncpa [#allocation8], 0
    %s13 = scalar_lea.sflag [#allocation8], 1
    %14 = vsyncpa %s13, 0
    %15 = vsyncpa [#allocation6], 0
    %s16 = scalar_lea.sflag [#allocation6], 1
    %17 = vsyncpa %s16, 0
    loop: start=0, step=1, limit=4
    $region2: #{tpu_custom_call.1} parent=1 // loop_pre_header
      _
    $region3: #{tpu_custom_call.1} parent=1 // loop_header
      %s19 = sphi 0, %s23
      %p20 = scmp.ge.s32.totalorder %s19, 4
      %s29 = sphi 0, %s31
      %s32 = sphi 0, %s29
      %s33 = sphi 0, %s32
      %s49 = sphi 0, %s33
      %s55 = sphi 0, %s57
      %s58 = sphi 0, %s55
      %s59 = sphi 0, %s58
      %s75 = sphi 0, %s59
      %s81 = sphi 0, %s83
      %s84 = sphi 0, %s81
      %s85 = sphi 0, %s84
      %s101 = sphi 0, %s85
    $region4: #{tpu_custom_call.1} parent=1 // loop_header_branch
      %22 = sbr.rel (%p20) target = $region8
    $region5: #{tpu_custom_call.1} parent=1 // loop_body
      %s24 = ssub.s32 %s19, 1
      %s25 = ssub.s32 %s19, 2
      %s26 = sadd.s32 %s19, 1
      %s27 = ssub.s32 %s19, %s26
      %p28 = scmp.eq.s32.totalorder %s27, 0
      %s30 = sadd.s32 %s29, 1
      %s31 = scalar_select %p28, %s29, %s30
      %p34 = pneg %p28
      %p35 = scmp.eq.s32.totalorder %s19, 1
      %p36 = por %p34, %p35
      %p37 = scmp.ne.s32.totalorder %s29, %s32
      %p38 = scmp.eq.s32.totalorder %s19, 0
      %p39 = por %p37, %p38
      %p40 = scmp.ne.s32.totalorder %s29, %s32
      %p41 = scmp.eq.s32.totalorder %s24, 1
      %p42 = por %p40, %p41
      %p43 = scmp.ne.s32.totalorder %s32, %s33
      %p44 = scmp.eq.s32.totalorder %s24, 0
      %p45 = por %p43, %p44
      %p46 = scmp.ne.s32.totalorder %s32, %s33
      %p47 = scmp.eq.s32.totalorder %s25, 1
      %p48 = por %p46, %p47
      %p50 = scmp.ne.s32.totalorder %s33, %s49
      %p51 = scmp.eq.s32.totalorder %s25, 0
      %p52 = por %p50, %p51
      %s53 = ssub.s32 %s19, %s26
      %p54 = scmp.eq.s32.totalorder %s53, 0
      %s56 = sadd.s32 %s55, 1
      %s57 = scalar_select %p54, %s55, %s56
      %p60 = pneg %p54
      %p61 = scmp.eq.s32.totalorder %s19, 1
      %p62 = por %p60, %p61
      %p63 = scmp.ne.s32.totalorder %s55, %s58
      %p64 = scmp.eq.s32.totalorder %s19, 0
      %p65 = por %p63, %p64
      %p66 = scmp.ne.s32.totalorder %s55, %s58
      %p67 = scmp.eq.s32.totalorder %s24, 1
      %p68 = por %p66, %p67
      %p69 = scmp.ne.s32.totalorder %s58, %s59
      %p70 = scmp.eq.s32.totalorder %s24, 0
      %p71 = por %p69, %p70
      %p72 = scmp.ne.s32.totalorder %s58, %s59
      %p73 = scmp.eq.s32.totalorder %s25, 1
      %p74 = por %p72, %p73
      %p76 = scmp.ne.s32.totalorder %s59, %s75
      %p77 = scmp.eq.s32.totalorder %s25, 0
      %p78 = por %p76, %p77
      %s79 = ssub.s32 %s19, %s26
      %p80 = scmp.eq.s32.totalorder %s79, 0
      %s82 = sadd.s32 %s81, 1
      %s83 = scalar_select %p80, %s81, %s82
      %p86 = pneg %p80
      %p87 = scmp.eq.s32.totalorder %s19, 1
      %p88 = por %p86, %p87
      %p89 = scmp.ne.s32.totalorder %s81, %s84
      %p90 = scmp.eq.s32.totalorder %s19, 0
      %p91 = por %p89, %p90
      %p92 = scmp.ne.s32.totalorder %s81, %s84
      %p93 = scmp.eq.s32.totalorder %s24, 1
      %p94 = por %p92, %p93
      %p95 = scmp.ne.s32.totalorder %s84, %s85
      %p96 = scmp.eq.s32.totalorder %s24, 0
      %p97 = por %p95, %p96
      %p98 = scmp.ne.s32.totalorder %s84, %s85
      %p99 = scmp.eq.s32.totalorder %s25, 1
      %p100 = por %p98, %p99
      %p102 = scmp.ne.s32.totalorder %s85, %s101
      %p103 = scmp.eq.s32.totalorder %s25, 0
      %p104 = por %p102, %p103
      %p105 = scmp.le.s32.totalorder 1, %s19
      %p106 = scmp.lt.s32.totalorder %s19, 3
      %p107 = pnand %p105, %p106
      %p108 = pneg %p107
      // Predicated region
      $region9: #{tpu_custom_call.1} parent=5 // pred_check
        _
      $region10: #{tpu_custom_call.1} parent=5 // pred_check_branch
        %110 = sbr.rel (%p107) target = $region12
      $region11: #{tpu_custom_call.1} parent=5 // pred_region
        %s111 = ssub.s32 %s19, 1
      $region12: #{tpu_custom_call.1} parent=5 // pred_fallthru
        _
      %p112 = scmp.lt.s32.totalorder %s19, 2
      // Predicated region
      $region13: #{tpu_custom_call.1} parent=5 // pred_check
        %p113 = pneg %p112
      $region14: #{tpu_custom_call.1} parent=5 // pred_check_branch
        %115 = sbr.rel (%p113) target = $region16
      $region15: #{tpu_custom_call.1} parent=5 // pred_region
        // Predicated region
        $region17: #{tpu_custom_call.1} parent=15 // pred_check
          %p116 = pneg %p39
        $region18: #{tpu_custom_call.1} parent=15 // pred_check_branch
          %118 = sbr.rel (%p116) target = $region20
        $region19: #{tpu_custom_call.1} parent=15 // pred_region
          %s119 = sand.u32 %s29, 1
          %s120 = scalar_lea.sflag [#allocation5], %s119
          %s121 = sand.u32 %s29, 1
          %s122 = smul.addr %s121, 8
          %s123 = scalar_lea.vmem [#allocation4], %s122
          %125 = vsyncadd %s120, 0
          %s126 = smul.addr %s19, 8
          %s127 = scalar_lea.hbm %s1, %s126
          %s129 = sshll.u32 %s127, 4
          %s130 = int_to_ptr.hbm [resolvable:$true] %s129
          %s131 = sshll.u32 %s123, 4
          %s132 = int_to_ptr.vmem [resolvable:$true] %s131
          %134 = dma.hbm_to_vmem [thread:$0]  %s130, 128, %s132, %s120
        $region20: #{tpu_custom_call.1} parent=15 // pred_fallthru
          _
        // Predicated region
        $region21: #{tpu_custom_call.1} parent=15 // pred_check
          %p135 = pneg %p65
        $region22: #{tpu_custom_call.1} parent=15 // pred_check_branch
          %137 = sbr.rel (%p135) target = $region24
        $region23: #{tpu_custom_call.1} parent=15 // pred_region
          %s138 = sand.u32 %s55, 1
          %s139 = scalar_lea.sflag [#allocation8], %s138
          %s140 = sand.u32 %s55, 1
          %s141 = smul.addr %s140, 8
          %s142 = scalar_lea.vmem [#allocation7], %s141
          %144 = vsyncadd %s139, 0
          %s145 = smul.addr %s19, 8
          %s146 = scalar_lea.hbm %s2, %s145
          %s148 = sshll.u32 %s146, 4
          %s149 = int_to_ptr.hbm [resolvable:$true] %s148
          %s150 = sshll.u32 %s142, 4
          %s151 = int_to_ptr.vmem [resolvable:$true] %s150
          %153 = dma.hbm_to_vmem [thread:$0]  %s149, 128, %s151, %s139
        $region24: #{tpu_custom_call.1} parent=15 // pred_fallthru
          _
      $region16: #{tpu_custom_call.1} parent=5 // pred_fallthru
        _
      %p154 = scmp.le.s32.totalorder 1, %s19
      %p155 = scmp.lt.s32.totalorder %s19, 3
      %p156 = pnand %p154, %p155
      %p157 = pneg %p156
      // Predicated region
      $region25: #{tpu_custom_call.1} parent=5 // pred_check
        _
      $region26: #{tpu_custom_call.1} parent=5 // pred_check_branch
        %159 = sbr.rel (%p156) target = $region28
      $region27: #{tpu_custom_call.1} parent=5 // pred_region
        %s160 = ssub.s32 %s19, 1
        %s161 = sand.u32 %s32, 1
        %s162 = scalar_lea.sflag [#allocation5], %s161
        %s163 = sand.u32 %s32, 1
        %s164 = smul.addr %s163, 8
        %s165 = scalar_lea.vmem [#allocation4], %s164
        // Predicated region
        $region29: #{tpu_custom_call.1} parent=27 // pred_check
          %p166 = pneg %p45
        $region30: #{tpu_custom_call.1} parent=27 // pred_check_branch
          %168 = sbr.rel (%p166) target = $region32
        $region31: #{tpu_custom_call.1} parent=27 // pred_region
          %170 = dma.done %s162, 128
        $region32: #{tpu_custom_call.1} parent=27 // pred_fallthru
          _
        %s171 = sand.u32 %s58, 1
        %s172 = scalar_lea.sflag [#allocation8], %s171
        %s173 = sand.u32 %s58, 1
        %s174 = smul.addr %s173, 8
        %s175 = scalar_lea.vmem [#allocation7], %s174
        // Predicated region
        $region33: #{tpu_custom_call.1} parent=27 // pred_check
          %p176 = pneg %p71
        $region34: #{tpu_custom_call.1} parent=27 // pred_check_branch
          %178 = sbr.rel (%p176) target = $region36
        $region35: #{tpu_custom_call.1} parent=27 // pred_region
          %180 = dma.done %s172, 128
        $region36: #{tpu_custom_call.1} parent=27 // pred_fallthru
          _
        %s181 = sand.u32 %s32, 1
        %s182 = scalar_lea.sflag [#allocation5], %s181
        %s183 = sand.u32 %s32, 1
        %s184 = smul.addr %s183, 8
        %s185 = scalar_lea.vmem [#allocation4], %s184
        %p186 = pneg %p45
        %p187 = pneg %p42
        %s188 = sand.u32 %s58, 1
        %s189 = scalar_lea.sflag [#allocation8], %s188
        %s190 = sand.u32 %s58, 1
        %s191 = smul.addr %s190, 8
        %s192 = scalar_lea.vmem [#allocation7], %s191
        %p193 = pneg %p71
        %p194 = pneg %p68
        %p195 = pneg %p97
        %p196 = pneg %p94
        %s197 = sand.u32 %s84, 1
        %s198 = scalar_lea.sflag [#allocation6], %s197
        %s199 = sand.u32 %s84, 1
        %s200 = smul.addr %s199, 8
        %s201 = scalar_lea.vmem [#allocation9], %s200
        %s202 = sld [smem:[#allocation3]]
        %v203 = vlaneseq
        %v204 = vand.u32 %v203, 127
        %v205 = vstv %s202
        %vm206 = vcmp.lt.s32.totalorder %v204, %v205
        %v207 = vld [vmem:[%s175] sm:$0xff]
        %v208 = vld [vmem:[%s165] sm:$0xff]
        %v209 = vsel %vm206, 1, 0
        %vm210 = vcmp.eq.s32.totalorder %v209, 1
        %v211 = vsel %vm210, %v207, %v208
        %vm212 = vcmask 261120
        %213 = vst.msk [vmem:[%s201] sm:$0xff] %vm212, %v211
        %s214 = sand.u32 %s84, 1
        %s215 = scalar_lea.sflag [#allocation6], %s214
        %s216 = sand.u32 %s84, 1
        %s217 = smul.addr %s216, 8
        %s218 = scalar_lea.vmem [#allocation9], %s217
        // Predicated region
        $region37: #{tpu_custom_call.1} parent=27 // pred_check
          %p219 = pneg %p94
        $region38: #{tpu_custom_call.1} parent=27 // pred_check_branch
          %221 = sbr.rel (%p219) target = $region40
        $region39: #{tpu_custom_call.1} parent=27 // pred_region
          %223 = vsyncadd %s215, 0
          %s224 = smul.addr %s24, 8
          %s225 = scalar_lea.hbm %s3, %s224
          %s227 = sshll.u32 %s218, 4
          %s228 = int_to_ptr.vmem [resolvable:$true] %s227
          %s229 = sshll.u32 %s225, 4
          %s230 = int_to_ptr.hbm [resolvable:$true] %s229
          %232 = dma.vmem_to_hbm [thread:$0]  %s228, 128, %s230, %s215
        $region40: #{tpu_custom_call.1} parent=27 // pred_fallthru
          _
      $region28: #{tpu_custom_call.1} parent=5 // pred_fallthru
        _
      %p233 = scmp.le.s32.totalorder 2, %s19
      // Predicated region
      $region41: #{tpu_custom_call.1} parent=5 // pred_check
        %p234 = pneg %p233
      $region42: #{tpu_custom_call.1} parent=5 // pred_check_branch
        %236 = sbr.rel (%p234) target = $region44
      $region43: #{tpu_custom_call.1} parent=5 // pred_region
        %s237 = ssub.s32 %s19, 2
        // Predicated region
        $region45: #{tpu_custom_call.1} parent=43 // pred_check
          %p238 = pneg %p100
        $region46: #{tpu_custom_call.1} parent=43 // pred_check_branch
          %240 = sbr.rel (%p238) target = $region48
        $region47: #{tpu_custom_call.1} parent=43 // pred_region
          %s241 = sand.u32 %s85, 1
          %s242 = scalar_lea.sflag [#allocation6], %s241
          %s243 = sand.u32 %s85, 1
          %s244 = smul.addr %s243, 8
          %s245 = scalar_lea.vmem [#allocation9], %s244
          %247 = dma.done %s242, 128
        $region48: #{tpu_custom_call.1} parent=43 // pred_fallthru
          _
      $region44: #{tpu_custom_call.1} parent=5 // pred_fallthru
        _
    $region6: #{tpu_custom_call.1} parent=1 // loop_footer
      %s23 = sadd.s32 1, %s19
    $region7: #{tpu_custom_call.1} parent=1 // loop_footer_branch
      %18 = sbr.rel target = $region3
    $region8: #{tpu_custom_call.1} parent=1 // loop_exit
      _
    %248 = vsyncpa [#allocation5], 1
    %s249 = scalar_lea.sflag [#allocation5], 1
    %250 = vsyncpa %s249, 1
    %251 = vsyncpa [#allocation8], 1
    %s252 = scalar_lea.sflag [#allocation8], 1
    %253 = vsyncpa %s252, 1
    %254 = vsyncpa [#allocation6], 1
    %s255 = scalar_lea.sflag [#allocation6], 1
    %256 = vsyncpa %s255, 1

</llo_original>
